<compile_context>
chip_gen: v7x
topology: tpu7x:2x2x1
jax: 0.10.0
libtpu: 0.0.40
codegen_flags: <defaults>
</compile_context>

<pallas_src>
import functools

import jax
import jax.numpy as jnp
from jax import lax
from jax.experimental import pallas as pl
from jax.experimental.pallas import tpu as pltpu


_CLIP = 0.99999
_EPS = 1e-12

# Conservative scoped-VMEM request: safe on v5e/v6e (128 MiB phys) and v7x (64 MiB/TC).
_VMEM_LIMIT_BYTES = 50 * 1024 * 1024
# Budget used when sizing pipeline buffers (headroom under the limit above).
_TILE_VMEM_BUDGET = 40 * 1024 * 1024
# Rough VMEM footprint below which the fully fused single-call path is used.
_FUSED_VMEM_BUDGET = 24 * 1024 * 1024


# -----------------------------------------------------------------------------------
# Fused fast path: one kernel, everything resident in VMEM.
# -----------------------------------------------------------------------------------
def _nc2_fused_kernel(means_ref, rowmax_ref):
    m = means_ref[...].astype(jnp.float32)                        # (C, D)
    g = jnp.mean(m, axis=0, keepdims=True)                        # (1, D)
    cen = m - g
    norm = jnp.sqrt(jnp.sum(cen * cen, axis=1, keepdims=True))    # (C, 1)
    n = cen / jnp.maximum(norm, _EPS)
    # n @ n.T without an explicit transpose (contract the feature dim of both sides).
    cos = lax.dot_general(n, n, (((1,), (1,)), ((), ())),
                          preferred_element_type=jnp.float32)     # (C, C)
    r = lax.broadcasted_iota(jnp.int32, cos.shape, 0)
    c = lax.broadcasted_iota(jnp.int32, cos.shape, 1)
    cos = jnp.where(r == c, -cos, cos)                            # flip diagonal sign
    rowmax_ref[...] = jnp.max(cos, axis=1, keepdims=True)         # (C, 1)


def _nc2_fused(means):
    C, _ = means.shape
    return pl.pallas_call(
        _nc2_fused_kernel,
        out_shape=jax.ShapeDtypeStruct((C, 1), jnp.float32),
        in_specs=[pl.BlockSpec(memory_space=pltpu.MemorySpace.VMEM)],
        out_specs=pl.BlockSpec(memory_space=pltpu.MemorySpace.VMEM),
        compiler_params=pltpu.CompilerParams(vmem_limit_bytes=_VMEM_LIMIT_BYTES),
    )(means)


# -----------------------------------------------------------------------------------
# Tiled path: row-tiled prologue (center + normalize + fused transpose) and a
# flash-style Gram row-max kernel that never materializes the (C, C) matrix.
# -----------------------------------------------------------------------------------
def _normalize_kernel(means_ref, gmean_ref, n_ref, nt_ref):
    m = means_ref[...].astype(jnp.float32)                        # (TMR, D)
    cen = m - gmean_ref[...]                                      # broadcast (1, D)
    norm = jnp.sqrt(jnp.sum(cen * cen, axis=1, keepdims=True))    # (TMR, 1)
    n = cen / jnp.maximum(norm, _EPS)
    n_ref[...] = n.astype(n_ref.dtype)
    # Fused transpose (XLU slot is idle in this memory-bound stage) -> second output
    # is already (D, TMR); no separate XLA-level transpose pass over HBM.
    nt_ref[...] = jnp.transpose(n).astype(nt_ref.dtype)


def _gram_rowmax_kernel(a_ref, bt_ref, rowmax_ref, *, tm, tn):
    i = pl.program_id(0)    # row block    ("parallel": shards across TensorCores)
    j = pl.program_id(1)    # col block    ("arbitrary": reduction, innermost)

    @pl.when(j == 0)
    def _():
        rowmax_ref[...] = jnp.full(rowmax_ref.shape, -jnp.inf, jnp.float32)

    # (TM, D) @ (D, TN) on the MXU, f32 accumulation (bt produced pre-transposed).
    tile = jnp.dot(a_ref[...], bt_ref[...], preferred_element_type=jnp.float32)

    row0 = i * tm
    col0 = j * tn
    # Does this tile intersect the global diagonal?  (TM and TN may differ.)
    on_diag = jnp.logical_and(row0 < col0 + tn, col0 < row0 + tm)

    @pl.when(jnp.logical_not(on_diag))
    def _():
        rowmax_ref[...] = jnp.maximum(
            rowmax_ref[...], jnp.max(tile, axis=1, keepdims=True))

    @pl.when(on_diag)
    def _():
        # cosine - 2*diag(diag(cosine)) == flip the diagonal sign.  Only evaluated on
        # tiles touching the diagonal, so overall masking cost is O(C*TN).
        r = lax.broadcasted_iota(jnp.int32, tile.shape, 0) + row0
        c = lax.broadcasted_iota(jnp.int32, tile.shape, 1) + col0
        flipped = jnp.where(r == c, -tile, tile)
        rowmax_ref[...] = jnp.maximum(
            rowmax_ref[...], jnp.max(flipped, axis=1, keepdims=True))


def _largest_divisor_tile(C, tile_max, candidates=(4096, 2048, 1024, 512, 256, 128)):
    for t in candidates:
        if t <= tile_max and C % t == 0:
            return t
    return None


def _nc2_tiled(means, use_bf16):
    C, D = means.shape
    op_dtype = jnp.bfloat16 if use_bf16 else jnp.float32
    op_size = 2 if use_bf16 else 4

    # Streamed column tile: MXU-native width (256 on v6e/v7x; v5e prefers 128 -- the
    # 128 fallback below also covers C not divisible by 256).
    tn = _largest_divisor_tile(C, 256, candidates=(256, 128))
    if tn is None:
        # TODO(synk): pad + mask ragged C (not a multiple of 128) in the tiled path.
        raise NotImplementedError(f"tiled NC2 path needs C % 128 == 0; got C={C}")

    # Resident row tile: as large as the VMEM budget allows.  The column stream is
    # re-read (C/TM) times from HBM, so bigger TM directly reduces HBM traffic.
    col_bytes = 2 * D * tn * op_size                 # double-buffered column stream
    per_row = 2 * D * op_size + 4 * tn + 16          # 2 row bufs + f32 result + out
    tm_max = max((_TILE_VMEM_BUDGET - col_bytes) // per_row, 128)
    tm = _largest_divisor_tile(C, tm_max)
    if tm is None:
        tm = tn

    # Prologue row tile (memory-bound; 1 input + 2 outputs, all double-buffered).
    tmr_max = max(_TILE_VMEM_BUDGET // (12 * D * 4), 128)
    tmr = _largest_divisor_tile(C, tmr_max, candidates=(1024, 512, 256, 128))
    if tmr is None:
        tmr = tn

    # g_mean: trivial XLA column mean (single read pass over `means`).
    gmean = jnp.mean(means.astype(jnp.float32), axis=0, keepdims=True)     # (1, D)

    # --- prologue: center + L2-normalize, emit means_n and its transpose -----------
    means_n, means_nt = pl.pallas_call(
        _normalize_kernel,
        out_shape=(jax.ShapeDtypeStruct((C, D), op_dtype),
                   jax.ShapeDtypeStruct((D, C), op_dtype)),
        grid_spec=pltpu.PrefetchScalarGridSpec(
            num_scalar_prefetch=0,
            grid=(C // tmr,),
            in_specs=[pl.BlockSpec((tmr, D), lambda i: (i, 0)),
                      pl.BlockSpec((1, D), lambda i: (0, 0))],
            out_specs=(pl.BlockSpec((tmr, D), lambda i: (i, 0)),
                       pl.BlockSpec((D, tmr), lambda i: (0, i))),
        ),
        compiler_params=pltpu.CompilerParams(
            dimension_semantics=("parallel",),
            vmem_limit_bytes=_VMEM_LIMIT_BYTES),
    )(means, gmean)

    # --- tiled Gram row-max: (C, C) cosine matrix never materialized ----------------
    rowmax = pl.pallas_call(
        functools.partial(_gram_rowmax_kernel, tm=tm, tn=tn),
        out_shape=jax.ShapeDtypeStruct((C, 1), jnp.float32),
        grid_spec=pltpu.PrefetchScalarGridSpec(
            num_scalar_prefetch=0,
            grid=(C // tm, C // tn),
            in_specs=[pl.BlockSpec((tm, D), lambda i, j: (i, 0)),   # resident over j
                      pl.BlockSpec((D, tn), lambda i, j: (0, j))],  # streamed
            out_specs=pl.BlockSpec((tm, 1), lambda i, j: (i, 0)),   # accumulator
        ),
        compiler_params=pltpu.CompilerParams(
            dimension_semantics=("parallel", "arbitrary"),
            vmem_limit_bytes=_VMEM_LIMIT_BYTES),
    )(means_n, means_nt)
    return rowmax


@functools.partial(jax.jit, static_argnames=("use_bf16", "force_tiled"))
def nc2_loss(means, *, use_bf16=False, force_tiled=False):
    """NC2 loss.  means: (C, D).  Returns (loss, max_cosine) as float32 scalars."""
    C, D = means.shape
    fused_bytes = (6 * C * D + 2 * C * C + 8 * C) * 4
    if (not force_tiled) and fused_bytes <= _FUSED_VMEM_BUDGET:
        rowmax = _nc2_fused(means)
    else:
        rowmax = _nc2_tiled(means, use_bf16)
    # O(C) epilogue in XLA: clip / acos / mean + global max (negligible cost).
    rowmax = rowmax.reshape(C)
    max_cosine = jnp.clip(jnp.max(rowmax), -_CLIP, _CLIP)
    loss = -jnp.mean(jnp.arccos(jnp.clip(rowmax, -_CLIP, _CLIP)))
    return loss, max_cosine


def nc2_loss_ref(means):
    """Pure-JAX reference (mirrors the PyTorch forward)."""
    m = means.astype(jnp.float32)
    g = jnp.mean(m, axis=0)
    c = m - g
    n = c / jnp.maximum(jnp.linalg.norm(c, axis=1, keepdims=True), _EPS)
    cos = n @ n.T
    cos = cos - 2.0 * jnp.diag(jnp.diag(cos))
    max_cos = jnp.clip(jnp.max(cos), -_CLIP, _CLIP)
    loss = -jnp.mean(jnp.arccos(jnp.clip(jnp.max(cos, axis=1), -_CLIP, _CLIP)))
    return loss, max_cos


if __name__ == "__main__":
    key = jax.random.PRNGKey(0)
    k1, k2 = jax.random.split(key)

    # Small case (fused single-kernel fast path): C classes, D-dim class means.
    C1, D1 = 8, 32
    means_small = jax.random.normal(k1, (C1, D1), dtype=jnp.float32)
    loss1, mc1 = nc2_loss(means_small)
    jax.block_until_ready((loss1, mc1))
    loss1_r, mc1_r = nc2_loss_ref(means_small)
    assert jnp.allclose(loss1, loss1_r, atol=1e-4), (loss1, loss1_r)
    assert jnp.allclose(mc1, mc1_r, atol=1e-4), (mc1, mc1_r)

    # Moderate case, tiled path forced (exercises prologue + Gram row-max kernels).
    C2, D2 = 512, 256
    means_big = jax.random.normal(k2, (C2, D2), dtype=jnp.float32)
    loss2, mc2 = nc2_loss(means_big, force_tiled=True)
    jax.block_until_ready((loss2, mc2))
    loss2_r, mc2_r = nc2_loss_ref(means_big)
    assert jnp.allclose(loss2, loss2_r, atol=3e-4), (loss2, loss2_r)
    assert jnp.allclose(mc2, mc2_r, atol=3e-4), (mc2, mc2_r)

    print("KERNEL_OK")
</pallas_src>

<mosaic_0001>
module attributes {stable_mosaic.version = 11 : i64} {
  func.func @_nc2_fused_kernel(%arg0: memref<8x32xf32, #tpu.memory_space<vmem>>, %arg1: memref<8x1xf32, #tpu.memory_space<vmem>>) attributes {dimension_semantics = [], scalar_prefetch = 0 : i64, scratch_operands = 0 : i64, tpu.core_type = #tpu.core_type<tc>} {
    %c0 = arith.constant 0 : index
    %c0_0 = arith.constant 0 : index
    %0 = vector.load %arg0[%c0, %c0_0] : memref<8x32xf32, #tpu.memory_space<vmem>>, vector<8x32xf32>
    %cst = arith.constant dense<0.000000e+00> : vector<32xf32>
    %1 = vector.multi_reduction <add>, %0, %cst [0] : vector<8x32xf32> to vector<32xf32>
    %2 = vector.shape_cast %1 : vector<32xf32> to vector<1x32xf32>
    %cst_1 = arith.constant 8.000000e+00 : f32
    %3 = vector.broadcast %cst_1 : f32 to vector<1x32xf32>
    %4 = arith.divf %2, %3 : vector<1x32xf32>
    %5 = vector.broadcast %4 : vector<1x32xf32> to vector<8x32xf32>
    %6 = arith.subf %0, %5 : vector<8x32xf32>
    %7 = arith.mulf %6, %6 : vector<8x32xf32>
    %cst_2 = arith.constant dense<0.000000e+00> : vector<8xf32>
    %8 = vector.multi_reduction <add>, %7, %cst_2 [1] : vector<8x32xf32> to vector<8xf32>
    %9 = vector.shape_cast %8 : vector<8xf32> to vector<8x1xf32>
    %10 = math.sqrt %9 : vector<8x1xf32>
    %cst_3 = arith.constant 9.99999996E-13 : f32
    %11 = vector.broadcast %cst_3 : f32 to vector<8x1xf32>
    %12 = arith.maximumf %10, %11 : vector<8x1xf32>
    %13 = vector.broadcast %12 : vector<8x1xf32> to vector<8x32xf32>
    %14 = arith.divf %6, %13 : vector<8x32xf32>
    %cst_4 = arith.constant dense<0.000000e+00> : vector<8x8xf32>
    %15 = tpu.matmul %14, %14, %cst_4 {dimension_numbers = #tpu.dot_dimension_numbers<[1], [1], [0], [0], [0, 0, 1, 0], [], []>} : vector<8x32xf32>, vector<8x32xf32>, vector<8x8xf32> -> vector<8x8xf32>
    %16 = tpu.iota {dimensions = array<i32: 0>} : vector<8x8xi32>
    %17 = tpu.iota {dimensions = array<i32: 1>} : vector<8x8xi32>
    %18 = arith.cmpi eq, %16, %17 : vector<8x8xi32>
    %cst_5 = arith.constant 0.000000e+00 : f32
    %19 = vector.broadcast %cst_5 : f32 to vector<8x8xf32>
    %20 = arith.subf %19, %15 : vector<8x8xf32>
    %21 = arith.select %18, %20, %15 : vector<8x8xi1>, vector<8x8xf32>
    %cst_6 = arith.constant dense<0xFF800000> : vector<8xf32>
    %22 = vector.multi_reduction <maximumf>, %21, %cst_6 [1] : vector<8x8xf32> to vector<8xf32>
    %23 = vector.shape_cast %22 : vector<8xf32> to vector<8x1xf32>
    %c0_7 = arith.constant 0 : index
    %c0_8 = arith.constant 0 : index
    %24 = vector.load %arg1[%c0_7, %c0_8] : memref<8x1xf32, #tpu.memory_space<vmem>>, vector<8x1xf32>
    tpu.vector_store %arg1[%c0_7, %c0_8], %23 {strides = array<i32>} : memref<8x1xf32, #tpu.memory_space<vmem>>, vector<8x1xf32>,
    return
  }
}

</mosaic_0001>

<llo_original>
// kernel: nc2_loss.1
$region0: #{nc2_loss.1}
  #allocation0 [shape = 'u32[]', space=smem, size = 0x4, offset = 0x4, fixed_abs, tag = 'smem constant byte address 0x4 - core index']
  #allocation1 [shape = 'u32[144,128]{1,0:T(1,128)}', space=vmem, size = 0x12000, scoped, tag = 'internal scratch']
  %s0 = inlined_call_operand.hbm [shape: f32[8,32], index: 0, kind: input, shape index: {}]
  %s1 = inlined_call_operand.vmem [shape: f32[8,1], index: 1, kind: output, shape index: {}]
  %s2 = sld [smem:[#allocation0]]
  $region18: #{nc2_loss.1} parent=0
    _
  %s4 = ssub.s32 1, %s2
  %s5 = scalar_select 0, %s4, %s2
  $region1: #{nc2_loss.1} parent=0
    #allocation2 [shape = 'u8[4096]{0}', space=vmem, size = 0x1000, scoped, tag = 'input window, operand 0, single buffered']
    #allocation3 [shape = 's32[1]{0}', space=sflag, size = 0x4, scoped, tag = 'scoped memory for nc2_loss.1']
    %6 = vsyncpa [#allocation3], 0
    // Predicated region
    $region2: #{nc2_loss.1} parent=1 // pred_check
      _
    $region3: #{nc2_loss.1} parent=1 // pred_check_branch
      %8 = sbr.rel (0) target = $region5
    $region4: #{nc2_loss.1} parent=1 // pred_region
      %s10 = ssub.s32 128, 128
      %11 = vsyncadd [#allocation3], %s10
      %s13 = sshll.u32 [#allocation2], 4
      %s14 = int_to_ptr.vmem [resolvable:$true] %s13
      %16 = dma.hbm_to_vmem [thread:$0]  %s0, 128, %s14, [#allocation3]
    $region5: #{nc2_loss.1} parent=1 // pred_fallthru
      _
    // Predicated region
    $region6: #{nc2_loss.1} parent=1 // pred_check
      _
    $region7: #{nc2_loss.1} parent=1 // pred_check_branch
      %18 = sbr.rel (0) target = $region9
    $region8: #{nc2_loss.1} parent=1 // pred_region
      %19 = dma.done [#allocation3], 128
    $region9: #{nc2_loss.1} parent=1 // pred_fallthru
      _
    %v20 = vld [vmem:[#allocation2] sm:$0xff]
    %vm21 = vcmask 261120
    %v22 = vsel %vm21, %v20, 0.0
    %v23 = vrot.slane %v22, 4
    %v24 = vadd.f32 %v22, %v23
    %v25 = vrot.slane %v24, 2
    %v26 = vadd.f32 %v24, %v25
    %v27 = vrot.slane %v26, 1
    %v28 = vadd.f32 %v26, %v27
    %v29 = vrcp.pop 8.0
    %v30 = vmul.f32 %v28, %v29
    %v31 = vsub.f32 %v20, %v30
    %v32 = vmul.f32 %v31, %v31
    %v33 = vsel %vm21, %v32, 0.0
    %34 = vadd.xlane.f32.xlu0 %v33
    %v35 = vpop.xlane.xlu0 %34
    %v36 = vrsqrt.pop %v35
    %v37 = vmul.f32 %v35, %v36
    %vm38 = vcmp.eq.f32.partialorder %v35, inf
    %v39 = vsel %vm38, %v35, %v37
    %vm40 = vcmp.eq.f32.partialorder %v35, 0.0
    %v41 = vand.u32 %v35, 2147483648
    %v42 = vsel %vm40, %v41, %v39
    %v43 = vmax.f32 %v42, 1e-12
    %v44 = vrcp.pop %v43
    %v45 = vmul.f32 %v31, %v44
    %v47 = vsel %vm21, %v45, 0
    %49 = vmatprep.subr.mxu0 0.0
    %50 = vmatpush1.xpose.msra.mxu0 %v47
    %51 = vmatprep.subr.mxu0 0.0
    %52 = vmatpush1.xpose.msra.mxu0 0.0
    %53 = vmatprep.subr.mxu0 0.0
    %54 = vmatpush1.xpose.msra.mxu0 0.0
    %55 = vmatprep.subr.mxu0 0.0
    %56 = vmatpush1.xpose.msra.mxu0 0.0
    %57 = vmatprep.subr.mxu0 0.0
    %58 = vmatpush1.xpose.msra.mxu0 0.0
    %59 = vmatprep.subr.mxu0 0.0
    %60 = vmatpush1.xpose.msra.mxu0 0.0
    %61 = vmatprep.subr.mxu0 0.0
    %62 = vmatpush1.xpose.msra.mxu0 0.0
    %63 = vmatprep.subr.mxu0 0.0
    %64 = vmatpush1.xpose.msra.mxu0 0.0
    %65 = vmatprep.subr.mxu0 0.0
    %66 = vmatpush1.xpose.msra.mxu0 0.0
    %67 = vmatprep.subr.mxu0 0.0
    %68 = vmatpush1.xpose.msra.mxu0 0.0
    %69 = vmatprep.subr.mxu0 0.0
    %70 = vmatpush1.xpose.msra.mxu0 0.0
    %71 = vmatprep.subr.mxu0 0.0
    %72 = vmatpush1.xpose.msra.mxu0 0.0
    %73 = vmatprep.subr.mxu0 0.0
    %74 = vmatpush1.xpose.msra.mxu0 0.0
    %75 = vmatprep.subr.mxu0 0.0
    %76 = vmatpush1.xpose.msra.mxu0 0.0
    %77 = vmatprep.subr.mxu0 0.0
    %78 = vmatpush1.xpose.msra.mxu0 0.0
    %79 = vmatprep.subr.mxu0 0.0
    %80 = vmatpush1.xpose.msra.mxu0 0.0
    %81 = vmatprep.subr.mxu0 0.0
    %82 = vmatpush1.xpose.msra.mxu0 0.0
    %83 = vmatprep.subr.mxu0 0.0
    %84 = vmatpush1.xpose.msra.mxu0 0.0
    %85 = vmatprep.subr.mxu0 0.0
    %86 = vmatpush1.xpose.msra.mxu0 0.0
    %87 = vmatprep.subr.mxu0 0.0
    %88 = vmatpush1.xpose.msra.mxu0 0.0
    %89 = vmatprep.subr.mxu0 0.0
    %90 = vmatpush1.xpose.msra.mxu0 0.0
    %91 = vmatprep.subr.mxu0 0.0
    %92 = vmatpush1.xpose.msra.mxu0 0.0
    %93 = vmatprep.subr.mxu0 0.0
    %94 = vmatpush1.xpose.msra.mxu0 0.0
    %95 = vmatprep.subr.mxu0 0.0
    %96 = vmatpush1.xpose.msra.mxu0 0.0
    %97 = vmatprep.subr.mxu0 0.0
    %98 = vmatpush1.xpose.msra.mxu0 0.0
    %99 = vmatprep.subr.mxu0 0.0
    %100 = vmatpush1.xpose.msra.mxu0 0.0
    %101 = vmatprep.subr.mxu0 0.0
    %102 = vmatpush1.xpose.msra.mxu0 0.0
    %103 = vmatprep.subr.mxu0 0.0
    %104 = vmatpush1.xpose.msra.mxu0 0.0
    %105 = vmatprep.subr.mxu0 0.0
    %106 = vmatpush1.xpose.msra.mxu0 0.0
    %107 = vmatprep.subr.mxu0 0.0
    %108 = vmatpush1.xpose.msra.mxu0 0.0
    %109 = vmatprep.subr.mxu0 0.0
    %110 = vmatpush1.xpose.msra.mxu0 0.0
    %111 = vmatprep.subr.mxu0 0.0
    %112 = vmatpush1.xpose.msra.mxu0 0.0
    %113 = vmatprep.mubr.f32.mxu0 0.0
    %114 = vmatmul.mubr.f32.gmra.mrb[0].mxu0 %v47
    %v115 = vpop.f32.mrb[0].mxu0
    %v116 = vadd.f32 0.0, %v115
    %v117 = vpop.f32.mrb[0].mxu0
    %118 = vdwg.mxu0
    %v119 = vlaneseq
    %v120 = vshrl.u32 %v119, 7
    %v121 = vlaneseq
    %v122 = vand.u32 %v121, 127
    %vm123 = vcmp.eq.s32.totalorder %v120, %v122
    %v124 = vsub.f32 0.0, %v116
    %v125 = vsel %vm123, %v124, %v116
    %vm126 = vcmask 64512
    %v127 = vsel %vm126, %v125, -inf
    %128 = vmax.xlane.f32.xlu0 %v127
    %v129 = vpop.xlane.xlu0 %128
    %vm130 = vcmask 7168
    %131 = vst.msk [vmem:[%s1] sm:$0xff] %vm130, %v129
    // Predicated region
    $region10: #{nc2_loss.1} parent=1 // pred_check
      _
    $region11: #{nc2_loss.1} parent=1 // pred_check_branch
      %133 = sbr.rel (0) target = $region13
    $region12: #{nc2_loss.1} parent=1 // pred_region
      _
    $region13: #{nc2_loss.1} parent=1 // pred_fallthru
      _
    // Predicated region
    $region14: #{nc2_loss.1} parent=1 // pred_check
      _
    $region15: #{nc2_loss.1} parent=1 // pred_check_branch
      %135 = sbr.rel (0) target = $region17
    $region16: #{nc2_loss.1} parent=1 // pred_region
      _
    $region17: #{nc2_loss.1} parent=1 // pred_fallthru
      _
    %136 = vsyncpa [#allocation3], 1

</llo_original>
